<compile_context>
chip_gen: v6e
topology: v6e:2x2x1
jax: 0.10.0
libtpu: 0.0.40
codegen_flags: <defaults>
</compile_context>

<pallas_src>
import jax
import jax.numpy as jnp
from jax.experimental import pallas as pl
from jax.experimental.pallas import tpu as pltpu


def dlinucb_kernel(h_ref, rhs_ref, g_ref, bias_ref, out_ref):
    # h_ref:   [rows, dp]        packed h   (dp = pack*d lanes)
    # rhs_ref: [dp, dp + pack]   [ block_diag(M)*pack | block_diag(theta^T) ]
    # g_ref:   [dp, pack]        block-diagonal ones (segmented lane reduce)
    # bias_ref:[1, 1]            SMEM scalar
    # out_ref: [rows, 2*pack]    lanes 0..pack-1 = mu, lanes pack..2*pack-1 = std
    hp = h_ref[...]                                            # [rows, dp]
    dp = hp.shape[1]

    # one MXU matmul yields both hm = h@M (per packed group) and pre-bias mu
    res = jnp.dot(hp, rhs_ref[...], preferred_element_type=jnp.float32)
    hm = res[:, :dp]                                           # [rows, dp]
    mu = res[:, dp:] + bias_ref[0, 0]                          # [rows, pack]

    # quadratic form: elementwise product + segmented lane reduce (MXU)
    p_var = hm * hp                                            # [rows, dp]
    var = jnp.dot(p_var, g_ref[...], preferred_element_type=jnp.float32)
    std = jnp.sqrt(jnp.maximum(var, 0.0))                      # clamp f32 rounding

    out_ref[...] = jnp.concatenate([mu, std], axis=1).astype(out_ref.dtype)


def precompute_M(A_inv, A_tilde):
    """h-independent part of the forward; compute once per belief update."""
    return (A_inv @ A_tilde) @ A_inv


def _round_up(x, m):
    return ((x + m - 1) // m) * m


def dlinucb_forward(h, theta_T, bias_mu, A_inv=None, A_tilde=None, M=None,
                    block_b=8192):
    """Returns (ypred_mu, ypred_std), both [B, 1] float32."""
    if M is None:
        M = precompute_M(A_inv, A_tilde)

    B, d = h.shape
    h = h.astype(jnp.float32)
    theta = jnp.asarray(theta_T, jnp.float32).reshape(d)
    M = jnp.asarray(M, jnp.float32)
    bias2d = jnp.asarray(bias_mu, jnp.float32).reshape(1, 1)

    # pack `pack` feature rows side by side on the 128-lane axis (free reshape)
    pack = (128 // d) if (d <= 128 and 128 % d == 0) else 1
    dp = pack * d
    row_align = 8 * pack                      # keep rows = B/pack sublane-aligned

    # --- choose the B tile and pad B (never collapse to one giant block) ---
    B_pad = _round_up(max(B, row_align), row_align)
    if B_pad > block_b:
        bt = _round_up(block_b, row_align)
        B_pad = _round_up(B_pad, bt)
    elif B_pad >= 4096:
        # >=2 grid steps so ("parallel",) can use both TensorCores on v7x
        bt = _round_up(pl.cdiv(B_pad, 2), row_align)
        B_pad = 2 * bt
    else:
        bt = B_pad
    grid = (B_pad // bt,)
    rows_t = bt // pack

    if B_pad != B:
        h = jnp.pad(h, ((0, B_pad - B), (0, 0)))   # zero rows -> mu=bias, std=0
    hp = h.reshape(B_pad // pack, dp)              # free row-major reshape

    # --- h-independent operands, built once in plain JAX ---
    eye_p = jnp.eye(pack, dtype=jnp.float32)
    M_blk = jnp.kron(eye_p, M)                                   # [dp, dp]
    T_blk = jnp.kron(eye_p, theta.reshape(d, 1))                 # [dp, pack]
    rhs = jnp.concatenate([M_blk, T_blk], axis=1)                # [dp, dp+pack]
    g_red = jnp.kron(eye_p, jnp.ones((d, 1), jnp.float32))       # [dp, pack]

    out = pl.pallas_call(
        dlinucb_kernel,
        out_shape=jax.ShapeDtypeStruct((B_pad // pack, 2 * pack), jnp.float32),
        grid=grid,
        in_specs=[
            # h tile; bump to pipeline_mode=pl.Buffered(3) only if DMA exposed
            pl.BlockSpec((rows_t, dp), lambda i: (i, 0)),
            pl.BlockSpec((dp, dp + pack), lambda i: (0, 0)),     # RHS: resident
            pl.BlockSpec((dp, pack), lambda i: (0, 0)),          # G: resident
            pl.BlockSpec(memory_space=pltpu.MemorySpace.SMEM),   # bias scalar
        ],
        out_specs=pl.BlockSpec((rows_t, 2 * pack), lambda i: (i, 0)),
        compiler_params=pltpu.CompilerParams(
            dimension_semantics=("parallel",)),                  # v7x: 2 TCs
    )(hp, rhs, g_red, bias2d)

    # lanes 0..pack-1 are mu, lanes pack..2*pack-1 are std; reshapes are free
    mu = out[:, :pack].reshape(-1, 1)[:B]
    std = out[:, pack:].reshape(-1, 1)[:B]
    return mu, std


def make_params(d, key):
    """Deterministic synthetic parameters (shapes match DLinUCBHead.__init__)."""
    k1, k2, k3, k4 = jax.random.split(key, 4)
    r1 = jax.random.normal(k1, (d, d), jnp.float32)
    A_inv = r1 @ r1.T / d + 0.1 * jnp.eye(d, dtype=jnp.float32)
    r2 = jax.random.normal(k2, (d, d), jnp.float32)
    A_tilde = r2 @ r2.T / d + 0.1 * jnp.eye(d, dtype=jnp.float32)
    theta_T = jax.random.normal(k3, (1, d), jnp.float32) * 0.1   # (A_inv @ b).T
    bias_mu = jax.random.normal(k4, (1,), jnp.float32) * 0.1
    return theta_T, bias_mu, A_inv, A_tilde


def _reference(h, theta_T, bias_mu, M):
    ref_mu = h @ theta_T.T + bias_mu
    ref_std = jnp.sqrt(jnp.sum((h @ M) * h, axis=1, keepdims=True))
    return ref_mu, ref_std


if __name__ == "__main__":
    d = 32                     # in_features
    key = jax.random.PRNGKey(0)
    kh, kp, kr = jax.random.split(key, 3)
    theta_T, bias_mu, A_inv, A_tilde = make_params(d, kp)

    # M is h-independent: compute once (caller caches it across forward calls)
    M = precompute_M(A_inv, A_tilde)

    # small batch (exercises the single-tile path with padding 8 -> 32 rows)
    B = 8
    h = jax.random.normal(kh, (B, d), jnp.float32)
    mu, std = dlinucb_forward(h, theta_T, bias_mu, M=M)
    jax.block_until_ready((mu, std))
    ref_mu, ref_std = _reference(h, theta_T, bias_mu, M)
    assert mu.shape == (B, 1) and std.shape == (B, 1)
    assert jnp.allclose(mu, ref_mu, atol=1e-4, rtol=1e-4)
    assert jnp.allclose(std, ref_std, atol=1e-4, rtol=1e-4)

    # ragged batch (exercises the zero-padding path instead of the old bt=B fallback)
    B2 = 100
    h2 = jax.random.normal(kr, (B2, d), jnp.float32)
    mu2, std2 = dlinucb_forward(h2, theta_T, bias_mu, M=M)
    jax.block_until_ready((mu2, std2))
    ref_mu2, ref_std2 = _reference(h2, theta_T, bias_mu, M)
    assert mu2.shape == (B2, 1) and std2.shape == (B2, 1)
    assert jnp.allclose(mu2, ref_mu2, atol=1e-4, rtol=1e-4)
    assert jnp.allclose(std2, ref_std2, atol=1e-4, rtol=1e-4)

    print("KERNEL_OK")
</pallas_src>

<mosaic_0001>
module attributes {stable_mosaic.version = 11 : i64} {
  func.func @dlinucb_kernel(%arg0: i32, %arg1: memref<8x128xf32, #tpu.memory_space<vmem>>, %arg2: memref<128x132xf32, #tpu.memory_space<vmem>>, %arg3: memref<128x4xf32, #tpu.memory_space<vmem>>, %arg4: memref<1x1xf32, #tpu.memory_space<smem>>, %arg5: memref<8x8xf32, #tpu.memory_space<vmem>>) attributes {dimension_semantics = [#tpu.dimension_semantics<parallel>], iteration_bounds = array<i64: 1>, scalar_prefetch = 0 : i64, scratch_operands = 0 : i64, tpu.core_type = #tpu.core_type<tc>, window_params = [{transform_indices = @transform_0, window_bounds = array<i64: 8, 128>}, {pipeline_mode = #tpu.pipeline_mode<synchronous>, transform_indices = @transform_1, window_bounds = array<i64: 128, 132>}, {pipeline_mode = #tpu.pipeline_mode<synchronous>, transform_indices = @transform_2, window_bounds = array<i64: 128, 4>}, {transform_indices = @transform_3, window_bounds = array<i64: 1, 1>}, {transform_indices = @transform_4, window_bounds = array<i64: 8, 8>}]} {
    %c0 = arith.constant 0 : index
    %c0_0 = arith.constant 0 : index
    %0 = vector.load %arg1[%c0, %c0_0] : memref<8x128xf32, #tpu.memory_space<vmem>>, vector<8x128xf32>
    %c0_1 = arith.constant 0 : index
    %c0_2 = arith.constant 0 : index
    %1 = vector.load %arg2[%c0_1, %c0_2] : memref<128x132xf32, #tpu.memory_space<vmem>>, vector<128x132xf32>
    %cst = arith.constant dense<0.000000e+00> : vector<8x132xf32>
    %2 = tpu.matmul %0, %1, %cst {dimension_numbers = #tpu.dot_dimension_numbers<[1], [0], [0], [1], [0, 0, 1, 1], [], []>} : vector<8x128xf32>, vector<128x132xf32>, vector<8x132xf32> -> vector<8x132xf32>
    %3 = vector.extract_strided_slice %2 {offsets = [0, 0], sizes = [8, 128], strides = [1, 1]} : vector<8x132xf32> to vector<8x128xf32>
    %4 = vector.extract_strided_slice %2 {offsets = [0, 128], sizes = [8, 4], strides = [1, 1]} : vector<8x132xf32> to vector<8x4xf32>
    %c0_3 = arith.constant 0 : index
    %c0_4 = arith.constant 0 : index
    %5 = memref.load %arg4[%c0_3, %c0_4] : memref<1x1xf32, #tpu.memory_space<smem>>
    %6 = vector.broadcast %5 : f32 to vector<8x4xf32>
    %7 = arith.addf %4, %6 : vector<8x4xf32>
    %8 = arith.mulf %3, %0 : vector<8x128xf32>
    %c0_5 = arith.constant 0 : index
    %c0_6 = arith.constant 0 : index
    %9 = vector.load %arg3[%c0_5, %c0_6] : memref<128x4xf32, #tpu.memory_space<vmem>>, vector<128x4xf32>
    %cst_7 = arith.constant dense<0.000000e+00> : vector<8x4xf32>
    %10 = tpu.matmul %8, %9, %cst_7 {dimension_numbers = #tpu.dot_dimension_numbers<[1], [0], [0], [1], [0, 0, 1, 1], [], []>} : vector<8x128xf32>, vector<128x4xf32>, vector<8x4xf32> -> vector<8x4xf32>
    %cst_8 = arith.constant 0.000000e+00 : f32
    %11 = vector.broadcast %cst_8 : f32 to vector<8x4xf32>
    %12 = arith.maximumf %10, %11 : vector<8x4xf32>
    %13 = math.sqrt %12 : vector<8x4xf32>
    %14 = tpu.concatenate %7, %13 in 1 : vector<8x4xf32>, vector<8x4xf32> -> vector<8x8xf32>
    %c0_9 = arith.constant 0 : index
    %c0_10 = arith.constant 0 : index
    %15 = vector.load %arg5[%c0_9, %c0_10] : memref<8x8xf32, #tpu.memory_space<vmem>>, vector<8x8xf32>
    tpu.vector_store %arg5[%c0_9, %c0_10], %14 {strides = array<i32>} : memref<8x8xf32, #tpu.memory_space<vmem>>, vector<8x8xf32>,
    return
  }
  func.func @transform_0(%arg0: i32) -> (i32, i32) {
    %c0_i32 = arith.constant 0 : i32
    %c0_i32_0 = arith.constant 0 : i32
    return %arg0, %c0_i32 : i32, i32
  }
  func.func @transform_1(%arg0: i32) -> (i32, i32) {
    %c0_i32 = arith.constant 0 : i32
    %c0_i32_0 = arith.constant 0 : i32
    %c0_i32_1 = arith.constant 0 : i32
    return %c0_i32, %c0_i32_0 : i32, i32
  }
  func.func @transform_2(%arg0: i32) -> (i32, i32) {
    %c0_i32 = arith.constant 0 : i32
    %c0_i32_0 = arith.constant 0 : i32
    %c0_i32_1 = arith.constant 0 : i32
    return %c0_i32, %c0_i32_0 : i32, i32
  }
  func.func @transform_3(%arg0: i32) -> (i32, i32) {
    %c0_i32 = arith.constant 0 : i32
    %c0_i32_0 = arith.constant 0 : i32
    %c0_i32_1 = arith.constant 0 : i32
    return %c0_i32, %c0_i32_0 : i32, i32
  }
  func.func @transform_4(%arg0: i32) -> (i32, i32) {
    %c0_i32 = arith.constant 0 : i32
    %c0_i32_0 = arith.constant 0 : i32
    return %arg0, %c0_i32 : i32, i32
  }
}

</mosaic_0001>

<llo_original>
// kernel: tpu_custom_call.1
$region0: #{tpu_custom_call.1}
  #allocation0 [shape = 'u32[]', space=smem, size = 0x4, offset = 0x4, fixed_abs, tag = 'smem constant byte address 0x4 - core index']
  #allocation1 [shape = 'u32[144,128]{1,0:T(1,128)}', space=vmem, size = 0x12000, scoped, tag = 'internal scratch']
  #allocation2 [shape = 'f32[1,1]{1,0:T(1,128)S(6)}', space=smem, size = 0x200, scoped, tag = 'scoped memory for tpu_custom_call.1']
  %s0 = inlined_call_operand.vmem [shape: f32[8,128], index: 0, kind: input, shape index: {}]
  %s1 = inlined_call_operand.vmem [shape: f32[128,132], index: 1, kind: input, shape index: {}]
  %s2 = inlined_call_operand.vmem [shape: f32[128,4], index: 2, kind: input, shape index: {}]
  %s3 = inlined_call_operand.<no memory space> [shape: f32[1,1], index: 3, kind: input, shape index: {}]
  %s4 = inlined_call_operand.hbm [shape: f32[8,8], index: 4, kind: output, shape index: {}]
  %s5 = sld [smem:[#allocation0]]
  $region26: #{tpu_custom_call.1} parent=0
    _
  %s7 = ssub.s32 1, %s5
  %s8 = scalar_select 0, %s7, %s5
  %9 = sst [smem:[#allocation2]] %s3
  $region1: #{tpu_custom_call.1} parent=0
    #allocation3 [shape = 'u8[4096]{0}', space=vmem, size = 0x1000, scoped, tag = 'output window, operand 0, single buffered']
    #allocation4 [shape = 's32[1]{0}', space=sflag, size = 0x4, scoped, tag = 'scoped memory for tpu_custom_call.1']
    %10 = vsyncpa [#allocation4], 0
    // Predicated region
    $region2: #{tpu_custom_call.1} parent=1 // pred_check
      _
    $region3: #{tpu_custom_call.1} parent=1 // pred_check_branch
      %12 = sbr.rel (0) target = $region5
    $region4: #{tpu_custom_call.1} parent=1 // pred_region
      _
    $region5: #{tpu_custom_call.1} parent=1 // pred_fallthru
      _
    // Predicated region
    $region6: #{tpu_custom_call.1} parent=1 // pred_check
      _
    $region7: #{tpu_custom_call.1} parent=1 // pred_check_branch
      %14 = sbr.rel (0) target = $region9
    $region8: #{tpu_custom_call.1} parent=1 // pred_region
      _
    $region9: #{tpu_custom_call.1} parent=1 // pred_fallthru
      _
    // Predicated region
    $region10: #{tpu_custom_call.1} parent=1 // pred_check
      _
    $region11: #{tpu_custom_call.1} parent=1 // pred_check_branch
      %16 = sbr.rel (0) target = $region13
    $region12: #{tpu_custom_call.1} parent=1 // pred_region
      _
    $region13: #{tpu_custom_call.1} parent=1 // pred_fallthru
      _
    // Predicated region
    $region14: #{tpu_custom_call.1} parent=1 // pred_check
      _
    $region15: #{tpu_custom_call.1} parent=1 // pred_check_branch
      %18 = sbr.rel (0) target = $region17
    $region16: #{tpu_custom_call.1} parent=1 // pred_region
      _
    $region17: #{tpu_custom_call.1} parent=1 // pred_fallthru
      _
    %v19 = vld [vmem:[%s0] sm:$0xff]
    %v20 = vld [vmem:[%s1] sm:$0xff]
    %v21 = vld [vmem:[%s1 + $0x8] sm:$0xff]
    %v22 = vld [vmem:[%s1 + $0x10] sm:$0xff]
    %v23 = vld [vmem:[%s1 + $0x18] sm:$0xff]
    %v24 = vld [vmem:[%s1 + $0x20] sm:$0xff]
    %v25 = vld [vmem:[%s1 + $0x28] sm:$0xff]
    %v26 = vld [vmem:[%s1 + $0x30] sm:$0xff]
    %v27 = vld [vmem:[%s1 + $0x38] sm:$0xff]
    %v28 = vld [vmem:[%s1 + $0x40] sm:$0xff]
    %v29 = vld [vmem:[%s1 + $0x48] sm:$0xff]
    %v30 = vld [vmem:[%s1 + $0x50] sm:$0xff]
    %v31 = vld [vmem:[%s1 + $0x58] sm:$0xff]
    %v32 = vld [vmem:[%s1 + $0x60] sm:$0xff]
    %v33 = vld [vmem:[%s1 + $0x68] sm:$0xff]
    %v34 = vld [vmem:[%s1 + $0x70] sm:$0xff]
    %v35 = vld [vmem:[%s1 + $0x78] sm:$0xff]
    %v36 = vld [vmem:[%s1 + $0x80] sm:$0xff]
    %v37 = vld [vmem:[%s1 + $0x88] sm:$0xff]
    %v38 = vld [vmem:[%s1 + $0x90] sm:$0xff]
    %v39 = vld [vmem:[%s1 + $0x98] sm:$0xff]
    %v40 = vld [vmem:[%s1 + $0xa0] sm:$0xff]
    %v41 = vld [vmem:[%s1 + $0xa8] sm:$0xff]
    %v42 = vld [vmem:[%s1 + $0xb0] sm:$0xff]
    %v43 = vld [vmem:[%s1 + $0xb8] sm:$0xff]
    %v44 = vld [vmem:[%s1 + $0xc0] sm:$0xff]
    %v45 = vld [vmem:[%s1 + $0xc8] sm:$0xff]
    %v46 = vld [vmem:[%s1 + $0xd0] sm:$0xff]
    %v47 = vld [vmem:[%s1 + $0xd8] sm:$0xff]
    %v48 = vld [vmem:[%s1 + $0xe0] sm:$0xff]
    %v49 = vld [vmem:[%s1 + $0xe8] sm:$0xff]
    %v50 = vld [vmem:[%s1 + $0xf0] sm:$0xff]
    %v51 = vld [vmem:[%s1 + $0xf8] sm:$0xff]
    %52 = vmatprep.subr.mxu0 %v51
    %53 = vmatpush1.msra.mxu0 %v50
    %54 = vmatprep.subr.mxu0 %v49
    %55 = vmatpush1.msra.mxu0 %v48
    %56 = vmatprep.subr.mxu0 %v47
    %57 = vmatpush1.msra.mxu0 %v46
    %58 = vmatprep.subr.mxu0 %v45
    %59 = vmatpush1.msra.mxu0 %v44
    %60 = vmatprep.subr.mxu0 %v43
    %61 = vmatpush1.msra.mxu0 %v42
    %62 = vmatprep.subr.mxu0 %v41
    %63 = vmatpush1.msra.mxu0 %v40
    %64 = vmatprep.subr.mxu0 %v39
    %65 = vmatpush1.msra.mxu0 %v38
    %66 = vmatprep.subr.mxu0 %v37
    %67 = vmatpush1.msra.mxu0 %v36
    %68 = vmatprep.subr.mxu0 %v35
    %69 = vmatpush1.msra.mxu0 %v34
    %70 = vmatprep.subr.mxu0 %v33
    %71 = vmatpush1.msra.mxu0 %v32
    %72 = vmatprep.subr.mxu0 %v31
    %73 = vmatpush1.msra.mxu0 %v30
    %74 = vmatprep.subr.mxu0 %v29
    %75 = vmatpush1.msra.mxu0 %v28
    %76 = vmatprep.subr.mxu0 %v27
    %77 = vmatpush1.msra.mxu0 %v26
    %78 = vmatprep.subr.mxu0 %v25
    %79 = vmatpush1.msra.mxu0 %v24
    %80 = vmatprep.subr.mxu0 %v23
    %81 = vmatpush1.msra.mxu0 %v22
    %82 = vmatprep.subr.mxu0 %v21
    %83 = vmatpush1.msra.mxu0 %v20
    %84 = vmatprep.subr.mxu0 0.0
    %85 = vmatpush2.msra.mxu0 0.0
    %86 = vmatprep.subr.mxu0 0.0
    %87 = vmatpush2.msra.mxu0 0.0
    %88 = vmatprep.subr.mxu0 0.0
    %89 = vmatpush2.msra.mxu0 0.0
    %90 = vmatprep.subr.mxu0 0.0
    %91 = vmatpush2.msra.mxu0 0.0
    %92 = vmatprep.subr.mxu0 0.0
    %93 = vmatpush2.msra.mxu0 0.0
    %94 = vmatprep.subr.mxu0 0.0
    %95 = vmatpush2.msra.mxu0 0.0
    %96 = vmatprep.subr.mxu0 0.0
    %97 = vmatpush2.msra.mxu0 0.0
    %98 = vmatprep.subr.mxu0 0.0
    %99 = vmatpush2.msra.mxu0 0.0
    %100 = vmatprep.subr.mxu0 0.0
    %101 = vmatpush2.msra.mxu0 0.0
    %102 = vmatprep.subr.mxu0 0.0
    %103 = vmatpush2.msra.mxu0 0.0
    %104 = vmatprep.subr.mxu0 0.0
    %105 = vmatpush2.msra.mxu0 0.0
    %106 = vmatprep.subr.mxu0 0.0
    %107 = vmatpush2.msra.mxu0 0.0
    %108 = vmatprep.subr.mxu0 0.0
    %109 = vmatpush2.msra.mxu0 0.0
    %110 = vmatprep.subr.mxu0 0.0
    %111 = vmatpush2.msra.mxu0 0.0
    %112 = vmatprep.subr.mxu0 0.0
    %113 = vmatpush2.msra.mxu0 0.0
    %114 = vmatprep.subr.mxu0 0.0
    %115 = vmatpush2.msra.mxu0 0.0
    %116 = vmatprep.mubr.f32.mxu0 0.0
    %117 = vmatmul.mubr.f32.gmra.mxu0 %v19
    %v118 = vpop.f32.mrf.mxu0
    %v119 = vadd.f32 0.0, %v118
    %v120 = vpop.f32.mrf.mxu0
    %v121 = vadd.f32 0.0, %v120
    %122 = vdwg.mxu0
    %s123 = sld [smem:[#allocation2]]
    %v124 = vstv %s123
    %v125 = vadd.f32 %v121, %v124
    %v126 = vmul.f32 %v119, %v19
    %v127 = vld [vmem:[%s2] sm:$0xff]
    %v128 = vld [vmem:[%s2 + $0x8] sm:$0xff]
    %v129 = vld [vmem:[%s2 + $0x10] sm:$0xff]
    %v130 = vld [vmem:[%s2 + $0x18] sm:$0xff]
    %v131 = vld [vmem:[%s2 + $0x20] sm:$0xff]
    %v132 = vld [vmem:[%s2 + $0x28] sm:$0xff]
    %v133 = vld [vmem:[%s2 + $0x30] sm:$0xff]
    %v134 = vld [vmem:[%s2 + $0x38] sm:$0xff]
    %v135 = vld [vmem:[%s2 + $0x40] sm:$0xff]
    %v136 = vld [vmem:[%s2 + $0x48] sm:$0xff]
    %v137 = vld [vmem:[%s2 + $0x50] sm:$0xff]
    %v138 = vld [vmem:[%s2 + $0x58] sm:$0xff]
    %v139 = vld [vmem:[%s2 + $0x60] sm:$0xff]
    %v140 = vld [vmem:[%s2 + $0x68] sm:$0xff]
    %v141 = vld [vmem:[%s2 + $0x70] sm:$0xff]
    %v142 = vld [vmem:[%s2 + $0x78] sm:$0xff]
    %143 = vmatprep.subr.mxu0 0.0
    %144 = vmatpush1.msra.mxu0 %v142
    %145 = vmatprep.subr.mxu0 0.0
    %146 = vmatpush1.msra.mxu0 %v141
    %147 = vmatprep.subr.mxu0 0.0
    %148 = vmatpush1.msra.mxu0 %v140
    %149 = vmatprep.subr.mxu0 0.0
    %150 = vmatpush1.msra.mxu0 %v139
    %151 = vmatprep.subr.mxu0 0.0
    %152 = vmatpush1.msra.mxu0 %v138
    %153 = vmatprep.subr.mxu0 0.0
    %154 = vmatpush1.msra.mxu0 %v137
    %155 = vmatprep.subr.mxu0 0.0
    %156 = vmatpush1.msra.mxu0 %v136
    %157 = vmatprep.subr.mxu0 0.0
    %158 = vmatpush1.msra.mxu0 %v135
    %159 = vmatprep.subr.mxu0 0.0
    %160 = vmatpush1.msra.mxu0 %v134
    %161 = vmatprep.subr.mxu0 0.0
    %162 = vmatpush1.msra.mxu0 %v133
    %163 = vmatprep.subr.mxu0 0.0
    %164 = vmatpush1.msra.mxu0 %v132
    %165 = vmatprep.subr.mxu0 0.0
    %166 = vmatpush1.msra.mxu0 %v131
    %167 = vmatprep.subr.mxu0 0.0
    %168 = vmatpush1.msra.mxu0 %v130
    %169 = vmatprep.subr.mxu0 0.0
    %170 = vmatpush1.msra.mxu0 %v129
    %171 = vmatprep.subr.mxu0 0.0
    %172 = vmatpush1.msra.mxu0 %v128
    %173 = vmatprep.subr.mxu0 0.0
    %174 = vmatpush1.msra.mxu0 %v127
    %175 = vmatprep.subr.mxu0 0.0
    %176 = vmatpush2.msra.mxu0 0.0
    %177 = vmatprep.subr.mxu0 0.0
    %178 = vmatpush2.msra.mxu0 0.0
    %179 = vmatprep.subr.mxu0 0.0
    %180 = vmatpush2.msra.mxu0 0.0
    %181 = vmatprep.subr.mxu0 0.0
    %182 = vmatpush2.msra.mxu0 0.0
    %183 = vmatprep.subr.mxu0 0.0
    %184 = vmatpush2.msra.mxu0 0.0
    %185 = vmatprep.subr.mxu0 0.0
    %186 = vmatpush2.msra.mxu0 0.0
    %187 = vmatprep.subr.mxu0 0.0
    %188 = vmatpush2.msra.mxu0 0.0
    %189 = vmatprep.subr.mxu0 0.0
    %190 = vmatpush2.msra.mxu0 0.0
    %191 = vmatprep.subr.mxu0 0.0
    %192 = vmatpush2.msra.mxu0 0.0
    %193 = vmatprep.subr.mxu0 0.0
    %194 = vmatpush2.msra.mxu0 0.0
    %195 = vmatprep.subr.mxu0 0.0
    %196 = vmatpush2.msra.mxu0 0.0
    %197 = vmatprep.subr.mxu0 0.0
    %198 = vmatpush2.msra.mxu0 0.0
    %199 = vmatprep.subr.mxu0 0.0
    %200 = vmatpush2.msra.mxu0 0.0
    %201 = vmatprep.subr.mxu0 0.0
    %202 = vmatpush2.msra.mxu0 0.0
    %203 = vmatprep.subr.mxu0 0.0
    %204 = vmatpush2.msra.mxu0 0.0
    %205 = vmatprep.subr.mxu0 0.0
    %206 = vmatpush2.msra.mxu0 0.0
    %207 = vmatprep.mubr.f32.mxu0 0.0
    %208 = vmatmul.mubr.f32.gmra.mxu0 %v126
    %v209 = vpop.f32.mrf.mxu0
    %v210 = vadd.f32 0.0, %v209
    %v211 = vpop.f32.mrf.mxu0
    %212 = vdwg.mxu0
    %v213 = vmax.f32 %v210, 0.0
    %v214 = vrsqrt.pop %v213
    %v215 = vmul.f32 %v213, %v214
    %vm216 = vcmp.eq.f32.partialorder %v213, inf
    %v217 = vsel %vm216, %v213, %v215
    %vm218 = vcmp.eq.f32.partialorder %v213, 0.0
    %v219 = vand.u32 %v213, 2147483648
    %v220 = vsel %vm218, %v219, %v217
    %222 = vrot.lane.b32.xlu0 %v220, 4
    %v223 = vpop.permute.xlu0 %222
    %vm225 = vcmask 31744
    %v226 = vsel %vm225, %v125, %v223
    %vm227 = vcmask 64512
    %228 = vst.msk [vmem:[#allocation3] sm:$0xff] %vm227, %v226
    // Predicated region
    $region18: #{tpu_custom_call.1} parent=1 // pred_check
      _
    $region19: #{tpu_custom_call.1} parent=1 // pred_check_branch
      %230 = sbr.rel (0) target = $region21
    $region20: #{tpu_custom_call.1} parent=1 // pred_region
      %s232 = ssub.s32 128, 128
      %233 = vsyncadd [#allocation4], %s232
      %s235 = sshll.u32 [#allocation3], 4
      %s236 = int_to_ptr.vmem [resolvable:$true] %s235
      %238 = dma.vmem_to_hbm [thread:$0]  %s236, 128, %s4, [#allocation4]
    $region21: #{tpu_custom_call.1} parent=1 // pred_fallthru
      _
    // Predicated region
    $region22: #{tpu_custom_call.1} parent=1 // pred_check
      _
    $region23: #{tpu_custom_call.1} parent=1 // pred_check_branch
      %240 = sbr.rel (0) target = $region25
    $region24: #{tpu_custom_call.1} parent=1 // pred_region
      %241 = dma.done [#allocation4], 128
    $region25: #{tpu_custom_call.1} parent=1 // pred_fallthru
      _
    %242 = vsyncpa [#allocation4], 1

</llo_original>
